<compile_context>
chip_gen: v6e
topology: v6e:2x2x1
jax: 0.10.0
libtpu: 0.0.40
codegen_flags: <defaults>
</compile_context>

<pallas_src>
import functools

import jax
import jax.numpy as jnp
import numpy as np
from jax import lax
from jax.experimental import pallas as pl
from jax.experimental.pallas import tpu as pltpu

EPS = 1e-5


def _round_up(n, m):
    return (n + m - 1) // m * m


def _stem_kernel(x_ref, w_ref, b_ref, out_ref, *, wf, lp):
    """Fused conv1(7x7, s2) + eval-BN + ReLU + maxpool1(3x3, s2) window max.

    x_ref:   (1, 16, Lp)  space-to-depth input: 4 stride-2 phases x 3 channels
                          (+4 zero rows), per-phase (Hf, Wf) spatial flattened
                          on the lane axis and zero-padded to Lp (mult. of 128).
    w_ref:   (Cout, 256)  conv1 weights regrouped per (tap (a,b), phase, cin),
                          BN scale folded in; invalid tap/phase combos are 0.
    b_ref:   (Cout, 1)    BN shift.
    out_ref: (1, Cout, Lp) stride-1 3x3 window max of the conv output on the
                          phase grid; stride-2 subsample + crop done in XLA.
    """
    x = x_ref[0]                                               # (16, Lp)

    # stride-2 7x7 conv == stride-1 4x4 conv over the space-to-depth phases:
    # one lane roll per tap (a, b) of the whole 16-row slab, one K=256 matmul.
    # Roll wrap-around / cross-row pollution only hits columns the final crop
    # discards, so no zero-padded scratch or masking is needed.
    taps = []
    for a in range(4):
        for b in range(4):
            off = a * wf + b
            taps.append(x if off == 0 else pltpu.roll(x, (lp - off) % lp, axis=1))
    patches = jnp.concatenate(taps, axis=0)                    # (256, Lp)

    h = jnp.dot(w_ref[...], patches, preferred_element_type=jnp.float32)
    h = jnp.maximum(h + b_ref[...], 0.0)                       # conv1+bn1+relu

    # maxpool1: separable stride-1 3x3 window max via 4 lane rolls; the
    # stride-2 subsample is a cheap XLA slice on the (tiny) kernel output.
    m = jnp.maximum(h, jnp.maximum(pltpu.roll(h, lp - 1, axis=1),
                                   pltpu.roll(h, lp - 2, axis=1)))
    m = jnp.maximum(m, jnp.maximum(pltpu.roll(m, lp - wf, axis=1),
                                   pltpu.roll(m, lp - 2 * wf, axis=1)))
    out_ref[0] = m                                             # lane-dense store


def prepare_stem_params(w1, s1, b1):
    """Regroup conv1 OIHW (Cout,3,7,7) weights into the (tap | phase,cin)
    layout used by the kernel and fold the eval-mode BN scale in."""
    w_np = np.asarray(w1, dtype=np.float32)
    cout, cin = w_np.shape[0], w_np.shape[1]
    assert cin == 3, "Inception.conv1 takes a 3-channel image"
    # Column index = (a*4 + b) * 16 + phase*3 + cin ; rows 12..15 are zero pad.
    w_cm = np.zeros((cout, 16, 16), np.float32)
    for a in range(4):
        for b in range(4):
            for pi, (rp, cp) in enumerate(((0, 0), (0, 1), (1, 0), (1, 1))):
                ky, kx = 2 * a + rp, 2 * b + cp
                if ky < 7 and kx < 7:
                    w_cm[:, a * 4 + b, pi * 3:pi * 3 + 3] = w_np[:, :, ky, kx]
    w_cm = jnp.asarray(w_cm.reshape(cout, 256)) * s1[:, None]
    return w_cm, jnp.reshape(b1, (cout, 1))


@jax.jit
def inception_stem(x_nchw, w_cm, shift):
    """conv1(7x7,s2,p0,no bias) + bn1(eval) + relu + maxpool1(3x3,s2).

    x_nchw: (B, 3, H, W) float32 -> (B, 64, Hp, Wp) float32.
    """
    B, Cin, H, W = x_nchw.shape
    cout = w_cm.shape[0]
    Ho, Wo = (H - 7) // 2 + 1, (W - 7) // 2 + 1        # conv1 output
    Hp, Wp = (Ho - 3) // 2 + 1, (Wo - 3) // 2 + 1      # maxpool1 output
    Hf, Wf = Ho + 3, Wo + 3                            # per-phase grid (covers all taps)
    Lp = _round_up(Hf * Wf, 128)                       # lane-padded flat spatial

    # Space-to-depth (pure layout plumbing): 4 stride-2 phases x Cin channels,
    # flattened spatially, zero-padded to 16 rows / Lp lanes.
    x_pad = jnp.zeros((B, Cin, 2 * Hf, 2 * Wf), jnp.float32)
    x_pad = x_pad.at[:, :, :H, :W].set(x_nchw)
    phases = [x_pad[:, :, rp::2, cp::2] for rp in (0, 1) for cp in (0, 1)]
    xp = jnp.stack(phases, axis=1).reshape(B, 4 * Cin, Hf * Wf)
    x_in = jnp.zeros((B, 16, Lp), jnp.float32).at[:, :4 * Cin, :Hf * Wf].set(xp)

    kernel = functools.partial(_stem_kernel, wf=Wf, lp=Lp)
    grid_spec = pltpu.PrefetchScalarGridSpec(
        num_scalar_prefetch=0,
        grid=(B,),
        in_specs=[
            pl.BlockSpec((1, 16, Lp), lambda i: (i, 0, 0)),
            pl.BlockSpec((cout, 256), lambda i: (0, 0)),
            pl.BlockSpec((cout, 1), lambda i: (0, 0)),
        ],
        out_specs=pl.BlockSpec((1, cout, Lp), lambda i: (i, 0, 0)),
    )
    out_flat = pl.pallas_call(
        kernel,
        out_shape=jax.ShapeDtypeStruct((B, cout, Lp), jnp.float32),
        grid_spec=grid_spec,
        compiler_params=pltpu.CompilerParams(
            dimension_semantics=("parallel",)),
    )(x_in, w_cm, shift)

    # stride-2 subsample + crop of the window-max map (tiny XLA slice).
    out = out_flat[:, :, :Hf * Wf].reshape(B, cout, Hf, Wf)
    return out[:, :, 0:2 * Hp:2, 0:2 * Wp:2]


def make_params(key, cout=64):
    """Deterministic synthetic conv1 weights + eval-mode BN (folded) params."""
    k1, kg, kb, km, kv = jax.random.split(key, 5)
    w1 = 0.1 * jax.random.normal(k1, (cout, 3, 7, 7), jnp.float32)
    gamma = 1.0 + 0.1 * jax.random.normal(kg, (cout,), jnp.float32)
    beta = 0.1 * jax.random.normal(kb, (cout,), jnp.float32)
    mean = 0.1 * jax.random.normal(km, (cout,), jnp.float32)
    var = jnp.abs(jax.random.normal(kv, (cout,), jnp.float32)) + 0.5
    scale = gamma / jnp.sqrt(var + EPS)
    shift = beta - mean * scale
    return w1, scale, shift


def reference_stem(x, w1, s1, b1):
    """Plain-JAX reference (eval-mode BN) used only for a correctness check."""
    dn = ('NCHW', 'OIHW', 'NCHW')
    h = lax.conv_general_dilated(x, w1, (2, 2), 'VALID', dimension_numbers=dn,
                                 precision=lax.Precision.HIGHEST)
    h = h * s1[None, :, None, None] + b1[None, :, None, None]
    h = jnp.maximum(h, 0.0)
    return lax.reduce_window(h, -jnp.inf, lax.max,
                             (1, 1, 3, 3), (1, 1, 2, 2), 'VALID')


if __name__ == "__main__":
    key = jax.random.PRNGKey(0)
    k_x, k_p = jax.random.split(key)

    B, H, W = 2, 35, 35                     # small image, 3 input channels
    x = jax.random.normal(k_x, (B, 3, H, W), jnp.float32)
    w1, s1, b1 = make_params(k_p)

    w_cm, shift = prepare_stem_params(w1, s1, b1)
    out = jax.block_until_ready(inception_stem(x, w_cm, shift))
    ref = jax.block_until_ready(reference_stem(x, w1, s1, b1))

    assert out.shape == ref.shape == (B, 64, 7, 7), (out.shape, ref.shape)
    np.testing.assert_allclose(np.asarray(out), np.asarray(ref),
                               rtol=2e-3, atol=2e-3)

    print("KERNEL_OK")
</pallas_src>

<mosaic_0001>
module attributes {stable_mosaic.version = 11 : i64} {
  func.func @_stem_kernel(%arg0: i32, %arg1: memref<1x16x384xf32, #tpu.memory_space<vmem>>, %arg2: memref<64x256xf32, #tpu.memory_space<vmem>>, %arg3: memref<64x1xf32, #tpu.memory_space<vmem>>, %arg4: memref<1x64x384xf32, #tpu.memory_space<vmem>>) attributes {dimension_semantics = [#tpu.dimension_semantics<parallel>], iteration_bounds = array<i64: 2>, scalar_prefetch = 0 : i64, scratch_operands = 0 : i64, tpu.core_type = #tpu.core_type<tc>, window_params = [{transform_indices = @transform_0, window_bounds = array<i64: 1, 16, 384>}, {pipeline_mode = #tpu.pipeline_mode<synchronous>, transform_indices = @transform_1, window_bounds = array<i64: 64, 256>}, {pipeline_mode = #tpu.pipeline_mode<synchronous>, transform_indices = @transform_2, window_bounds = array<i64: 64, 1>}, {transform_indices = @transform_3, window_bounds = array<i64: 1, 64, 384>}]} {
    %c0 = arith.constant 0 : index
    %c0_0 = arith.constant 0 : index
    %c0_1 = arith.constant 0 : index
    %0 = vector.load %arg1[%c0, %c0_0, %c0_1] : memref<1x16x384xf32, #tpu.memory_space<vmem>>, vector<1x16x384xf32>
    %1 = vector.shape_cast %0 : vector<1x16x384xf32> to vector<16x384xf32>
    %c383_i32 = arith.constant 383 : i32
    %2 = tpu.dynamic_rotate %1 by %c383_i32 dim 1 : vector<16x384xf32>, i32 -> vector<16x384xf32>
    %c382_i32 = arith.constant 382 : i32
    %3 = tpu.dynamic_rotate %1 by %c382_i32 dim 1 : vector<16x384xf32>, i32 -> vector<16x384xf32>
    %c381_i32 = arith.constant 381 : i32
    %4 = tpu.dynamic_rotate %1 by %c381_i32 dim 1 : vector<16x384xf32>, i32 -> vector<16x384xf32>
    %c366_i32 = arith.constant 366 : i32
    %5 = tpu.dynamic_rotate %1 by %c366_i32 dim 1 : vector<16x384xf32>, i32 -> vector<16x384xf32>
    %c365_i32 = arith.constant 365 : i32
    %6 = tpu.dynamic_rotate %1 by %c365_i32 dim 1 : vector<16x384xf32>, i32 -> vector<16x384xf32>
    %c364_i32 = arith.constant 364 : i32
    %7 = tpu.dynamic_rotate %1 by %c364_i32 dim 1 : vector<16x384xf32>, i32 -> vector<16x384xf32>
    %c363_i32 = arith.constant 363 : i32
    %8 = tpu.dynamic_rotate %1 by %c363_i32 dim 1 : vector<16x384xf32>, i32 -> vector<16x384xf32>
    %c348_i32 = arith.constant 348 : i32
    %9 = tpu.dynamic_rotate %1 by %c348_i32 dim 1 : vector<16x384xf32>, i32 -> vector<16x384xf32>
    %c347_i32 = arith.constant 347 : i32
    %10 = tpu.dynamic_rotate %1 by %c347_i32 dim 1 : vector<16x384xf32>, i32 -> vector<16x384xf32>
    %c346_i32 = arith.constant 346 : i32
    %11 = tpu.dynamic_rotate %1 by %c346_i32 dim 1 : vector<16x384xf32>, i32 -> vector<16x384xf32>
    %c345_i32 = arith.constant 345 : i32
    %12 = tpu.dynamic_rotate %1 by %c345_i32 dim 1 : vector<16x384xf32>, i32 -> vector<16x384xf32>
    %c330_i32 = arith.constant 330 : i32
    %13 = tpu.dynamic_rotate %1 by %c330_i32 dim 1 : vector<16x384xf32>, i32 -> vector<16x384xf32>
    %c329_i32 = arith.constant 329 : i32
    %14 = tpu.dynamic_rotate %1 by %c329_i32 dim 1 : vector<16x384xf32>, i32 -> vector<16x384xf32>
    %c328_i32 = arith.constant 328 : i32
    %15 = tpu.dynamic_rotate %1 by %c328_i32 dim 1 : vector<16x384xf32>, i32 -> vector<16x384xf32>
    %c327_i32 = arith.constant 327 : i32
    %16 = tpu.dynamic_rotate %1 by %c327_i32 dim 1 : vector<16x384xf32>, i32 -> vector<16x384xf32>
    %17 = tpu.concatenate %1, %2, %3, %4, %5, %6, %7, %8, %9, %10, %11, %12, %13, %14, %15, %16 in 0 : vector<16x384xf32>, vector<16x384xf32>, vector<16x384xf32>, vector<16x384xf32>, vector<16x384xf32>, vector<16x384xf32>, vector<16x384xf32>, vector<16x384xf32>, vector<16x384xf32>, vector<16x384xf32>, vector<16x384xf32>, vector<16x384xf32>, vector<16x384xf32>, vector<16x384xf32>, vector<16x384xf32>, vector<16x384xf32> -> vector<256x384xf32>
    %c0_2 = arith.constant 0 : index
    %c0_3 = arith.constant 0 : index
    %18 = vector.load %arg2[%c0_2, %c0_3] : memref<64x256xf32, #tpu.memory_space<vmem>>, vector<64x256xf32>
    %cst = arith.constant dense<0.000000e+00> : vector<64x384xf32>
    %19 = tpu.matmul %18, %17, %cst {dimension_numbers = #tpu.dot_dimension_numbers<[1], [0], [0], [1], [0, 0, 1, 1], [], []>} : vector<64x256xf32>, vector<256x384xf32>, vector<64x384xf32> -> vector<64x384xf32>
    %c0_4 = arith.constant 0 : index
    %c0_5 = arith.constant 0 : index
    %20 = vector.load %arg3[%c0_4, %c0_5] : memref<64x1xf32, #tpu.memory_space<vmem>>, vector<64x1xf32>
    %21 = vector.broadcast %20 : vector<64x1xf32> to vector<64x384xf32>
    %22 = arith.addf %19, %21 : vector<64x384xf32>
    %cst_6 = arith.constant 0.000000e+00 : f32
    %23 = vector.broadcast %cst_6 : f32 to vector<64x384xf32>
    %24 = arith.maximumf %22, %23 : vector<64x384xf32>
    %c383_i32_7 = arith.constant 383 : i32
    %25 = tpu.dynamic_rotate %24 by %c383_i32_7 dim 1 : vector<64x384xf32>, i32 -> vector<64x384xf32>
    %c382_i32_8 = arith.constant 382 : i32
    %26 = tpu.dynamic_rotate %24 by %c382_i32_8 dim 1 : vector<64x384xf32>, i32 -> vector<64x384xf32>
    %27 = arith.maximumf %25, %26 : vector<64x384xf32>
    %28 = arith.maximumf %24, %27 : vector<64x384xf32>
    %c366_i32_9 = arith.constant 366 : i32
    %29 = tpu.dynamic_rotate %28 by %c366_i32_9 dim 1 : vector<64x384xf32>, i32 -> vector<64x384xf32>
    %c348_i32_10 = arith.constant 348 : i32
    %30 = tpu.dynamic_rotate %28 by %c348_i32_10 dim 1 : vector<64x384xf32>, i32 -> vector<64x384xf32>
    %31 = arith.maximumf %29, %30 : vector<64x384xf32>
    %32 = arith.maximumf %28, %31 : vector<64x384xf32>
    %c0_11 = arith.constant 0 : index
    %c0_12 = arith.constant 0 : index
    %c0_13 = arith.constant 0 : index
    %33 = vector.load %arg4[%c0_11, %c0_12, %c0_13] : memref<1x64x384xf32, #tpu.memory_space<vmem>>, vector<1x64x384xf32>
    %34 = vector.shape_cast %33 : vector<1x64x384xf32> to vector<64x384xf32>
    %35 = vector.shape_cast %32 : vector<64x384xf32> to vector<1x64x384xf32>
    tpu.vector_store %arg4[%c0_11, %c0_12, %c0_13], %35 {strides = array<i32>} : memref<1x64x384xf32, #tpu.memory_space<vmem>>, vector<1x64x384xf32>,
    return
  }
  func.func @transform_0(%arg0: i32) -> (i32, i32, i32) {
    %c0_i32 = arith.constant 0 : i32
    %c0_i32_0 = arith.constant 0 : i32
    %c0_i32_1 = arith.constant 0 : i32
    return %arg0, %c0_i32, %c0_i32_0 : i32, i32, i32
  }
  func.func @transform_1(%arg0: i32) -> (i32, i32) {
    %c0_i32 = arith.constant 0 : i32
    %c0_i32_0 = arith.constant 0 : i32
    %c0_i32_1 = arith.constant 0 : i32
    return %c0_i32, %c0_i32_0 : i32, i32
  }
  func.func @transform_2(%arg0: i32) -> (i32, i32) {
    %c0_i32 = arith.constant 0 : i32
    %c0_i32_0 = arith.constant 0 : i32
    %c0_i32_1 = arith.constant 0 : i32
    return %c0_i32, %c0_i32_0 : i32, i32
  }
  func.func @transform_3(%arg0: i32) -> (i32, i32, i32) {
    %c0_i32 = arith.constant 0 : i32
    %c0_i32_0 = arith.constant 0 : i32
    %c0_i32_1 = arith.constant 0 : i32
    return %arg0, %c0_i32, %c0_i32_0 : i32, i32, i32
  }
}

</mosaic_0001>

<llo_original>
// kernel: inception_stem.1
$region0: #{inception_stem.1}
  #allocation0 [shape = 'u32[]', space=smem, size = 0x4, offset = 0x4, fixed_abs, tag = 'smem constant byte address 0x4 - core index']
  #allocation1 [shape = 'u32[144,128]{1,0:T(1,128)}', space=vmem, size = 0x12000, scoped, tag = 'internal scratch']
  %s0 = inlined_call_operand.vmem [shape: f32[2,16,384], index: 0, kind: input, shape index: {}]
  %s1 = inlined_call_operand.vmem [shape: f32[64,256], index: 1, kind: input, shape index: {}]
  %s2 = inlined_call_operand.vmem [shape: f32[64,1], index: 2, kind: input, shape index: {}]
  %s3 = inlined_call_operand.vmem [shape: f32[2,64,384], index: 3, kind: output, shape index: {}]
  %s4 = sld [smem:[#allocation0]]
  $region45: #{inception_stem.1} parent=0
    _
  %s6 = ssub.s32 1, %s4
  %s7 = scalar_select 0, %s6, %s4
  loop: start=0, step=1, limit=4
  $region2: #{inception_stem.1} parent=0 // loop_pre_header
    _
  $region3: #{inception_stem.1} parent=0 // loop_header
    %s9 = sphi 0, %s13
    %p10 = scmp.ge.s32.totalorder %s9, 4
    %s19 = sphi 0, %s21
    %s22 = sphi 0, %s19
    %s23 = sphi 0, %s22
    %s39 = sphi 0, %s23
    %s43 = sphi 0, %s43
    %s45 = sphi 0, %s43
    %s46 = sphi 0, %s45
    %s60 = sphi 0, %s46
    %s64 = sphi 0, %s64
    %s66 = sphi 0, %s64
    %s67 = sphi 0, %s66
    %s81 = sphi 0, %s67
    %s87 = sphi 0, %s89
    %s90 = sphi 0, %s87
    %s91 = sphi 0, %s90
    %s107 = sphi 0, %s91
  $region4: #{inception_stem.1} parent=0 // loop_header_branch
    %12 = sbr.rel (%p10) target = $region8
  $region5: #{inception_stem.1} parent=0 // loop_body
    %s14 = ssub.s32 %s9, 1
    %s15 = ssub.s32 %s9, 2
    %s16 = sadd.s32 %s9, 1
    %s17 = ssub.s32 %s9, %s16
    %p18 = scmp.eq.s32.totalorder %s17, 0
    %s20 = sadd.s32 %s19, 1
    %s21 = scalar_select %p18, %s19, %s20
    %p24 = pneg %p18
    %p25 = scmp.eq.s32.totalorder %s9, 1
    %p26 = por %p24, %p25
    %p27 = scmp.ne.s32.totalorder %s19, %s22
    %p28 = scmp.eq.s32.totalorder %s9, 0
    %p29 = por %p27, %p28
    %p30 = scmp.ne.s32.totalorder %s19, %s22
    %p31 = scmp.eq.s32.totalorder %s14, 1
    %p32 = por %p30, %p31
    %p33 = scmp.ne.s32.totalorder %s22, %s23
    %p34 = scmp.eq.s32.totalorder %s14, 0
    %p35 = por %p33, %p34
    %p36 = scmp.ne.s32.totalorder %s22, %s23
    %p37 = scmp.eq.s32.totalorder %s15, 1
    %p38 = por %p36, %p37
    %p40 = scmp.ne.s32.totalorder %s23, %s39
    %p41 = scmp.eq.s32.totalorder %s15, 0
    %p42 = por %p40, %p41
    %s44 = sadd.s32 %s43, 1
    %p47 = scmp.eq.s32.totalorder %s9, 1
    %p48 = scmp.ne.s32.totalorder %s43, %s45
    %p49 = scmp.eq.s32.totalorder %s9, 0
    %p50 = por %p48, %p49
    %p51 = scmp.ne.s32.totalorder %s43, %s45
    %p52 = scmp.eq.s32.totalorder %s14, 1
    %p53 = por %p51, %p52
    %p54 = scmp.ne.s32.totalorder %s45, %s46
    %p55 = scmp.eq.s32.totalorder %s14, 0
    %p56 = por %p54, %p55
    %p57 = scmp.ne.s32.totalorder %s45, %s46
    %p58 = scmp.eq.s32.totalorder %s15, 1
    %p59 = por %p57, %p58
    %p61 = scmp.ne.s32.totalorder %s46, %s60
    %p62 = scmp.eq.s32.totalorder %s15, 0
    %p63 = por %p61, %p62
    %s65 = sadd.s32 %s64, 1
    %p68 = scmp.eq.s32.totalorder %s9, 1
    %p69 = scmp.ne.s32.totalorder %s64, %s66
    %p70 = scmp.eq.s32.totalorder %s9, 0
    %p71 = por %p69, %p70
    %p72 = scmp.ne.s32.totalorder %s64, %s66
    %p73 = scmp.eq.s32.totalorder %s14, 1
    %p74 = por %p72, %p73
    %p75 = scmp.ne.s32.totalorder %s66, %s67
    %p76 = scmp.eq.s32.totalorder %s14, 0
    %p77 = por %p75, %p76
    %p78 = scmp.ne.s32.totalorder %s66, %s67
    %p79 = scmp.eq.s32.totalorder %s15, 1
    %p80 = por %p78, %p79
    %p82 = scmp.ne.s32.totalorder %s67, %s81
    %p83 = scmp.eq.s32.totalorder %s15, 0
    %p84 = por %p82, %p83
    %s85 = ssub.s32 %s9, %s16
    %p86 = scmp.eq.s32.totalorder %s85, 0
    %s88 = sadd.s32 %s87, 1
    %s89 = scalar_select %p86, %s87, %s88
    %p92 = pneg %p86
    %p93 = scmp.eq.s32.totalorder %s9, 1
    %p94 = por %p92, %p93
    %p95 = scmp.ne.s32.totalorder %s87, %s90
    %p96 = scmp.eq.s32.totalorder %s9, 0
    %p97 = por %p95, %p96
    %p98 = scmp.ne.s32.totalorder %s87, %s90
    %p99 = scmp.eq.s32.totalorder %s14, 1
    %p100 = por %p98, %p99
    %p101 = scmp.ne.s32.totalorder %s90, %s91
    %p102 = scmp.eq.s32.totalorder %s14, 0
    %p103 = por %p101, %p102
    %p104 = scmp.ne.s32.totalorder %s90, %s91
    %p105 = scmp.eq.s32.totalorder %s15, 1
    %p106 = por %p104, %p105
    %p108 = scmp.ne.s32.totalorder %s91, %s107
    %p109 = scmp.eq.s32.totalorder %s15, 0
    %p110 = por %p108, %p109
    %p111 = scmp.le.s32.totalorder 1, %s9
    %p112 = scmp.lt.s32.totalorder %s9, 3
    %p113 = pnand %p111, %p112
    %p114 = pneg %p113
    // Predicated region
    $region9: #{inception_stem.1} parent=5 // pred_check
      _
    $region10: #{inception_stem.1} parent=5 // pred_check_branch
      %116 = sbr.rel (%p113) target = $region12
    $region11: #{inception_stem.1} parent=5 // pred_region
      %s117 = ssub.s32 %s9, 1
      // Predicated region
      $region13: #{inception_stem.1} parent=11 // pred_check
        %p118 = pneg %p56
      $region14: #{inception_stem.1} parent=11 // pred_check_branch
        %120 = sbr.rel (%p118) target = $region16
      $region15: #{inception_stem.1} parent=11 // pred_region
        _
      $region16: #{inception_stem.1} parent=11 // pred_fallthru
        _
      // Predicated region
      $region17: #{inception_stem.1} parent=11 // pred_check
        %p121 = pneg %p77
      $region18: #{inception_stem.1} parent=11 // pred_check_branch
        %123 = sbr.rel (%p121) target = $region20
      $region19: #{inception_stem.1} parent=11 // pred_region
        _
      $region20: #{inception_stem.1} parent=11 // pred_fallthru
        _
    $region12: #{inception_stem.1} parent=5 // pred_fallthru
      _
    %p124 = scmp.lt.s32.totalorder %s9, 2
    // Predicated region
    $region21: #{inception_stem.1} parent=5 // pred_check
      %p125 = pneg %p124
    $region22: #{inception_stem.1} parent=5 // pred_check_branch
      %127 = sbr.rel (%p125) target = $region24
    $region23: #{inception_stem.1} parent=5 // pred_region
      // Predicated region
      $region25: #{inception_stem.1} parent=23 // pred_check
        %p128 = pneg %p29
      $region26: #{inception_stem.1} parent=23 // pred_check_branch
        %130 = sbr.rel (%p128) target = $region28
      $region27: #{inception_stem.1} parent=23 // pred_region
        %p131 = scmp.lt.s32.totalorder %s9, 1
        %s132 = scalar_select %p131, %s9, 1
        %s133 = smul.addr %s132, 6
        %s134 = smul.addr %s133, 8
        %s135 = scalar_lea.vmem %s0, %s134
      $region28: #{inception_stem.1} parent=23 // pred_fallthru
        _
    $region24: #{inception_stem.1} parent=5 // pred_fallthru
      _
    %p136 = scmp.le.s32.totalorder 1, %s9
    %p137 = scmp.lt.s32.totalorder %s9, 3
    %p138 = pnand %p136, %p137
    %p139 = pneg %p138
    // Predicated region
    $region29: #{inception_stem.1} parent=5 // pred_check
      _
    $region30: #{inception_stem.1} parent=5 // pred_check_branch
      %141 = sbr.rel (%p138) target = $region32
    $region31: #{inception_stem.1} parent=5 // pred_region
      %s142 = ssub.s32 %s9, 1
      %p143 = scmp.lt.s32.totalorder %s14, 1
      %s144 = scalar_select %p143, %s14, 1
      %s145 = smul.addr %s144, 6
      %s146 = smul.addr %s145, 8
      %s147 = scalar_lea.vmem %s0, %s146
      %p148 = pneg %p35
      %p149 = pneg %p32
      %p150 = pneg %p56
      %p151 = pneg %p53
      %p152 = pneg %p77
      %p153 = pneg %p74
      %p154 = pneg %p103
      %p155 = pneg %p100
      %p156 = scmp.lt.s32.totalorder %s14, 1
      %s157 = scalar_select %p156, %s14, 1
      %s158 = smul.addr %s157, 24
      %s159 = smul.addr %s158, 8
      %s160 = scalar_lea.vmem %s3, %s159
      %p161 = scmp.lt.s32.totalorder %s14, 1
      %s162 = scalar_select %p161, %s14, 1
      %s163 = smul.addr %s162, 6
      %s164 = smul.addr %s163, 8
      %s165 = scalar_lea.vmem %s0, %s164
      %p166 = scmp.lt.s32.totalorder %s14, 1
      %s167 = scalar_select %p166, %s14, 1
      %s168 = smul.addr %s167, 24
      %s169 = smul.addr %s168, 8
      %s170 = scalar_lea.vmem %s3, %s169
      %v171 = vld [vmem:[%s165] sm:$0xff]
      %v172 = vld [vmem:[%s165 + $0x8] sm:$0xff]
      %v173 = vld [vmem:[%s165 + $0x10] sm:$0xff]
      %v174 = vld [vmem:[%s165 + $0x18] sm:$0xff]
      %v175 = vld [vmem:[%s165 + $0x20] sm:$0xff]
      %v176 = vld [vmem:[%s165 + $0x28] sm:$0xff]
      %177 = vrot.lane.b32.xlu0 %v171, 127
      %v178 = vpop.permute.xlu0 %177
      %179 = vrot.lane.b32.xlu0 %v174, 127
      %v180 = vpop.permute.xlu0 %179
      %181 = vrot.lane.b32.xlu0 %v172, 127
      %v182 = vpop.permute.xlu0 %181
      %183 = vrot.lane.b32.xlu0 %v175, 127
      %v184 = vpop.permute.xlu0 %183
      %185 = vrot.lane.b32.xlu0 %v173, 127
      %v186 = vpop.permute.xlu0 %185
      %187 = vrot.lane.b32.xlu0 %v176, 127
      %v188 = vpop.permute.xlu0 %187
      %v189 = vlaneseq
      %v190 = vand.u32 %v189, 127
      %vm191 = vcmp.lt.s32.totalorder %v190, 127
      %v192 = vsel %vm191, %v182, %v186
      %v193 = vsel %vm191, %v184, %v188
      %v194 = vsel %vm191, %v178, %v182
      %v195 = vsel %vm191, %v180, %v184
      %v196 = vsel %vm191, %v186, %v178
      %v197 = vsel %vm191, %v188, %v180
      %198 = vrot.lane.b32.xlu0 %v171, 126
      %v199 = vpop.permute.xlu0 %198
      %200 = vrot.lane.b32.xlu0 %v174, 126
      %v201 = vpop.permute.xlu0 %200
      %202 = vrot.lane.b32.xlu0 %v172, 126
      %v203 = vpop.permute.xlu0 %202
      %204 = vrot.lane.b32.xlu0 %v175, 126
      %v205 = vpop.permute.xlu0 %204
      %206 = vrot.lane.b32.xlu0 %v173, 126
      %v207 = vpop.permute.xlu0 %206
      %208 = vrot.lane.b32.xlu0 %v176, 126
      %v209 = vpop.permute.xlu0 %208
      %vm210 = vcmp.lt.s32.totalorder %v190, 126
      %v211 = vsel %vm210, %v203, %v207
      %v212 = vsel %vm210, %v205, %v209
      %v213 = vsel %vm210, %v199, %v203
      %v214 = vsel %vm210, %v201, %v205
      %v215 = vsel %vm210, %v207, %v199
      %v216 = vsel %vm210, %v209, %v201
      %217 = vrot.lane.b32.xlu0 %v171, 125
      %v218 = vpop.permute.xlu0 %217
      %219 = vrot.lane.b32.xlu0 %v174, 125
      %v220 = vpop.permute.xlu0 %219
      %221 = vrot.lane.b32.xlu0 %v172, 125
      %v222 = vpop.permute.xlu0 %221
      %223 = vrot.lane.b32.xlu0 %v175, 125
      %v224 = vpop.permute.xlu0 %223
      %225 = vrot.lane.b32.xlu0 %v173, 125
      %v226 = vpop.permute.xlu0 %225
      %227 = vrot.lane.b32.xlu0 %v176, 125
      %v228 = vpop.permute.xlu0 %227
      %vm229 = vcmp.lt.s32.totalorder %v190, 125
      %v230 = vsel %vm229, %v222, %v226
      %v231 = vsel %vm229, %v224, %v228
      %v232 = vsel %vm229, %v218, %v222
      %v233 = vsel %vm229, %v220, %v224
      %v234 = vsel %vm229, %v226, %v218
      %v235 = vsel %vm229, %v228, %v220
      %236 = vrot.lane.b32.xlu0 %v171, 110
      %v237 = vpop.permute.xlu0 %236
      %238 = vrot.lane.b32.xlu0 %v174, 110
      %v239 = vpop.permute.xlu0 %238
      %240 = vrot.lane.b32.xlu0 %v172, 110
      %v241 = vpop.permute.xlu0 %240
      %242 = vrot.lane.b32.xlu0 %v175, 110
      %v243 = vpop.permute.xlu0 %242
      %244 = vrot.lane.b32.xlu0 %v173, 110
      %v245 = vpop.permute.xlu0 %244
      %246 = vrot.lane.b32.xlu0 %v176, 110
      %v247 = vpop.permute.xlu0 %246
      %vm248 = vcmp.lt.s32.totalorder %v190, 110
      %v249 = vsel %vm248, %v241, %v245
      %v250 = vsel %vm248, %v243, %v247
      %v251 = vsel %vm248, %v237, %v241
      %v252 = vsel %vm248, %v239, %v243
      %v253 = vsel %vm248, %v245, %v237
      %v254 = vsel %vm248, %v247, %v239
      %255 = vrot.lane.b32.xlu0 %v171, 109
      %v256 = vpop.permute.xlu0 %255
      %257 = vrot.lane.b32.xlu0 %v174, 109
      %v258 = vpop.permute.xlu0 %257
      %259 = vrot.lane.b32.xlu0 %v172, 109
      %v260 = vpop.permute.xlu0 %259
      %261 = vrot.lane.b32.xlu0 %v175, 109
      %v262 = vpop.permute.xlu0 %261
      %263 = vrot.lane.b32.xlu0 %v173, 109
      %v264 = vpop.permute.xlu0 %263
      %265 = vrot.lane.b32.xlu0 %v176, 109
      %v266 = vpop.permute.xlu0 %265
      %vm267 = vcmp.lt.s32.totalorder %v190, 109
      %v268 = vsel %vm267, %v260, %v264
      %v269 = vsel %vm267, %v262, %v266
      %v270 = vsel %vm267, %v256, %v260
      %v271 = vsel %vm267, %v258, %v262
      %v272 = vsel %vm267, %v264, %v256
      %v273 = vsel %vm267, %v266, %v258
      %274 = vrot.lane.b32.xlu0 %v171, 108
      %v275 = vpop.permute.xlu0 %274
      %276 = vrot.lane.b32.xlu0 %v174, 108
      %v277 = vpop.permute.xlu0 %276
      %278 = vrot.lane.b32.xlu0 %v172, 108
      %v279 = vpop.permute.xlu0 %278
      %280 = vrot.lane.b32.xlu0 %v175, 108
      %v281 = vpop.permute.xlu0 %280
      %282 = vrot.lane.b32.xlu0 %v173, 108
      %v283 = vpop.permute.xlu0 %282
      %284 = vrot.lane.b32.xlu0 %v176, 108
      %v285 = vpop.permute.xlu0 %284
      %vm286 = vcmp.lt.s32.totalorder %v190, 108
      %v287 = vsel %vm286, %v279, %v283
      %v288 = vsel %vm286, %v281, %v285
      %v289 = vsel %vm286, %v275, %v279
      %v290 = vsel %vm286, %v277, %v281
      %v291 = vsel %vm286, %v283, %v275
      %v292 = vsel %vm286, %v285, %v277
      %293 = vrot.lane.b32.xlu0 %v171, 107
      %v294 = vpop.permute.xlu0 %293
      %295 = vrot.lane.b32.xlu0 %v174, 107
      %v296 = vpop.permute.xlu0 %295
      %297 = vrot.lane.b32.xlu0 %v172, 107
      %v298 = vpop.permute.xlu0 %297
      %299 = vrot.lane.b32.xlu0 %v175, 107
      %v300 = vpop.permute.xlu0 %299
      %301 = vrot.lane.b32.xlu0 %v173, 107
      %v302 = vpop.permute.xlu0 %301
      %303 = vrot.lane.b32.xlu0 %v176, 107
      %v304 = vpop.permute.xlu0 %303
      %vm305 = vcmp.lt.s32.totalorder %v190, 107
      %v306 = vsel %vm305, %v298, %v302
      %v307 = vsel %vm305, %v300, %v304
      %v308 = vsel %vm305, %v294, %v298
      %v309 = vsel %vm305, %v296, %v300
      %v310 = vsel %vm305, %v302, %v294
      %v311 = vsel %vm305, %v304, %v296
      %312 = vrot.lane.b32.xlu0 %v171, 92
      %v313 = vpop.permute.xlu0 %312
      %314 = vrot.lane.b32.xlu0 %v174, 92
      %v315 = vpop.permute.xlu0 %314
      %316 = vrot.lane.b32.xlu0 %v172, 92
      %v317 = vpop.permute.xlu0 %316
      %318 = vrot.lane.b32.xlu0 %v175, 92
      %v319 = vpop.permute.xlu0 %318
      %320 = vrot.lane.b32.xlu0 %v173, 92
      %v321 = vpop.permute.xlu0 %320
      %322 = vrot.lane.b32.xlu0 %v176, 92
      %v323 = vpop.permute.xlu0 %322
      %vm324 = vcmp.lt.s32.totalorder %v190, 92
      %v325 = vsel %vm324, %v317, %v321
      %v326 = vsel %vm324, %v319, %v323
      %v327 = vsel %vm324, %v313, %v317
      %v328 = vsel %vm324, %v315, %v319
      %v329 = vsel %vm324, %v321, %v313
      %v330 = vsel %vm324, %v323, %v315
      %331 = vrot.lane.b32.xlu0 %v171, 91
      %v332 = vpop.permute.xlu0 %331
      %333 = vrot.lane.b32.xlu0 %v174, 91
      %v334 = vpop.permute.xlu0 %333
      %335 = vrot.lane.b32.xlu0 %v172, 91
      %v336 = vpop.permute.xlu0 %335
      %337 = vrot.lane.b32.xlu0 %v175, 91
      %v338 = vpop.permute.xlu0 %337
      %339 = vrot.lane.b32.xlu0 %v173, 91
      %v340 = vpop.permute.xlu0 %339
      %341 = vrot.lane.b32.xlu0 %v176, 91
      %v342 = vpop.permute.xlu0 %341
      %vm343 = vcmp.lt.s32.totalorder %v190, 91
      %v344 = vsel %vm343, %v336, %v340
      %v345 = vsel %vm343, %v338, %v342
      %v346 = vsel %vm343, %v332, %v336
      %v347 = vsel %vm343, %v334, %v338
      %v348 = vsel %vm343, %v340, %v332
      %v349 = vsel %vm343, %v342, %v334
      %350 = vrot.lane.b32.xlu0 %v171, 90
      %v351 = vpop.permute.xlu0 %350
      %352 = vrot.lane.b32.xlu0 %v174, 90
      %v353 = vpop.permute.xlu0 %352
      %354 = vrot.lane.b32.xlu0 %v172, 90
      %v355 = vpop.permute.xlu0 %354
      %356 = vrot.lane.b32.xlu0 %v175, 90
      %v357 = vpop.permute.xlu0 %356
      %358 = vrot.lane.b32.xlu0 %v173, 90
      %v359 = vpop.permute.xlu0 %358
      %360 = vrot.lane.b32.xlu0 %v176, 90
      %v361 = vpop.permute.xlu0 %360
      %vm362 = vcmp.lt.s32.totalorder %v190, 90
      %v363 = vsel %vm362, %v355, %v359
      %v364 = vsel %vm362, %v357, %v361
      %v365 = vsel %vm362, %v351, %v355
      %v366 = vsel %vm362, %v353, %v357
      %v367 = vsel %vm362, %v359, %v351
      %v368 = vsel %vm362, %v361, %v353
      %369 = vrot.lane.b32.xlu0 %v171, 89
      %v370 = vpop.permute.xlu0 %369
      %371 = vrot.lane.b32.xlu0 %v174, 89
      %v372 = vpop.permute.xlu0 %371
      %373 = vrot.lane.b32.xlu0 %v172, 89
      %v374 = vpop.permute.xlu0 %373
      %375 = vrot.lane.b32.xlu0 %v175, 89
      %v376 = vpop.permute.xlu0 %375
      %377 = vrot.lane.b32.xlu0 %v173, 89
      %v378 = vpop.permute.xlu0 %377
      %379 = vrot.lane.b32.xlu0 %v176, 89
      %v380 = vpop.permute.xlu0 %379
      %vm381 = vcmp.lt.s32.totalorder %v190, 89
      %v382 = vsel %vm381, %v374, %v378
      %v383 = vsel %vm381, %v376, %v380
      %v384 = vsel %vm381, %v370, %v374
      %v385 = vsel %vm381, %v372, %v376
      %v386 = vsel %vm381, %v378, %v370
      %v387 = vsel %vm381, %v380, %v372
      %388 = vrot.lane.b32.xlu0 %v171, 74
      %v389 = vpop.permute.xlu0 %388
      %390 = vrot.lane.b32.xlu0 %v174, 74
      %v391 = vpop.permute.xlu0 %390
      %392 = vrot.lane.b32.xlu0 %v172, 74
      %v393 = vpop.permute.xlu0 %392
      %394 = vrot.lane.b32.xlu0 %v175, 74
      %v395 = vpop.permute.xlu0 %394
      %396 = vrot.lane.b32.xlu0 %v173, 74
      %v397 = vpop.permute.xlu0 %396
      %398 = vrot.lane.b32.xlu0 %v176, 74
      %v399 = vpop.permute.xlu0 %398
      %vm400 = vcmp.lt.s32.totalorder %v190, 74
      %v401 = vsel %vm400, %v393, %v397
      %v402 = vsel %vm400, %v395, %v399
      %v403 = vsel %vm400, %v389, %v393
      %v404 = vsel %vm400, %v391, %v395
      %v405 = vsel %vm400, %v397, %v389
      %v406 = vsel %vm400, %v399, %v391
      %407 = vrot.lane.b32.xlu0 %v171, 73
      %v408 = vpop.permute.xlu0 %407
      %409 = vrot.lane.b32.xlu0 %v174, 73
      %v410 = vpop.permute.xlu0 %409
      %411 = vrot.lane.b32.xlu0 %v172, 73
      %v412 = vpop.permute.xlu0 %411
      %413 = vrot.lane.b32.xlu0 %v175, 73
      %v414 = vpop.permute.xlu0 %413
      %415 = vrot.lane.b32.xlu0 %v173, 73
      %v416 = vpop.permute.xlu0 %415
      %417 = vrot.lane.b32.xlu0 %v176, 73
      %v418 = vpop.permute.xlu0 %417
      %vm419 = vcmp.lt.s32.totalorder %v190, 73
      %v420 = vsel %vm419, %v412, %v416
      %v421 = vsel %vm419, %v414, %v418
      %v422 = vsel %vm419, %v408, %v412
      %v423 = vsel %vm419, %v410, %v414
      %v424 = vsel %vm419, %v416, %v408
      %v425 = vsel %vm419, %v418, %v410
      %426 = vrot.lane.b32.xlu0 %v171, 72
      %v427 = vpop.permute.xlu0 %426
      %428 = vrot.lane.b32.xlu0 %v174, 72
      %v429 = vpop.permute.xlu0 %428
      %430 = vrot.lane.b32.xlu0 %v172, 72
      %v431 = vpop.permute.xlu0 %430
      %432 = vrot.lane.b32.xlu0 %v175, 72
      %v433 = vpop.permute.xlu0 %432
      %434 = vrot.lane.b32.xlu0 %v173, 72
      %v435 = vpop.permute.xlu0 %434
      %436 = vrot.lane.b32.xlu0 %v176, 72
      %v437 = vpop.permute.xlu0 %436
      %vm438 = vcmp.lt.s32.totalorder %v190, 72
      %v439 = vsel %vm438, %v431, %v435
      %v440 = vsel %vm438, %v433, %v437
      %v441 = vsel %vm438, %v427, %v431
      %v442 = vsel %vm438, %v429, %v433
      %v443 = vsel %vm438, %v435, %v427
      %v444 = vsel %vm438, %v437, %v429
      %445 = vrot.lane.b32.xlu0 %v171, 71
      %v446 = vpop.permute.xlu0 %445
      %447 = vrot.lane.b32.xlu0 %v174, 71
      %v448 = vpop.permute.xlu0 %447
      %449 = vrot.lane.b32.xlu0 %v172, 71
      %v450 = vpop.permute.xlu0 %449
      %451 = vrot.lane.b32.xlu0 %v175, 71
      %v452 = vpop.permute.xlu0 %451
      %453 = vrot.lane.b32.xlu0 %v173, 71
      %v454 = vpop.permute.xlu0 %453
      %455 = vrot.lane.b32.xlu0 %v176, 71
      %v456 = vpop.permute.xlu0 %455
      %vm457 = vcmp.lt.s32.totalorder %v190, 71
      %v458 = vsel %vm457, %v450, %v454
      %v459 = vsel %vm457, %v452, %v456
      %v460 = vsel %vm457, %v446, %v450
      %v461 = vsel %vm457, %v448, %v452
      %v462 = vsel %vm457, %v454, %v446
      %v463 = vsel %vm457, %v456, %v448
      %v464 = vld [vmem:[%s1] sm:$0xff]
      %v465 = vld [vmem:[%s1 + $0x8] sm:$0xff]
      %v466 = vld [vmem:[%s1 + $0x10] sm:$0xff]
      %v467 = vld [vmem:[%s1 + $0x18] sm:$0xff]
      %v468 = vld [vmem:[%s1 + $0x20] sm:$0xff]
      %v469 = vld [vmem:[%s1 + $0x28] sm:$0xff]
      %v470 = vld [vmem:[%s1 + $0x30] sm:$0xff]
      %v471 = vld [vmem:[%s1 + $0x38] sm:$0xff]
      %v472 = vld [vmem:[%s1 + $0x40] sm:$0xff]
      %v473 = vld [vmem:[%s1 + $0x48] sm:$0xff]
      %v474 = vld [vmem:[%s1 + $0x50] sm:$0xff]
      %v475 = vld [vmem:[%s1 + $0x58] sm:$0xff]
      %v476 = vld [vmem:[%s1 + $0x60] sm:$0xff]
      %v477 = vld [vmem:[%s1 + $0x68] sm:$0xff]
      %v478 = vld [vmem:[%s1 + $0x70] sm:$0xff]
      %v479 = vld [vmem:[%s1 + $0x78] sm:$0xff]
      %v480 = vld [vmem:[%s2] sm:$0xff]
      %v481 = vld [vmem:[%s2 + $0x8] sm:$0xff]
      %v482 = vld [vmem:[%s2 + $0x10] sm:$0xff]
      %v483 = vld [vmem:[%s2 + $0x18] sm:$0xff]
      %v484 = vld [vmem:[%s2 + $0x20] sm:$0xff]
      %v485 = vld [vmem:[%s2 + $0x28] sm:$0xff]
      %v486 = vld [vmem:[%s2 + $0x30] sm:$0xff]
      %v487 = vld [vmem:[%s2 + $0x38] sm:$0xff]
      %489 = vset.pattern.permute.xlu0 0
      %490 = vperm.xlu0 %489, %v480
      %v491 = vpop.permute.xlu0 %490
      %494 = vset.pattern.permute.xlu0 0
      %495 = vperm.xlu0 %494, %v481
      %v496 = vpop.permute.xlu0 %495
      %499 = vset.pattern.permute.xlu0 0
      %500 = vperm.xlu0 %499, %v482
      %v501 = vpop.permute.xlu0 %500
      %504 = vset.pattern.permute.xlu0 0
      %505 = vperm.xlu0 %504, %v483
      %v506 = vpop.permute.xlu0 %505
      %509 = vset.pattern.permute.xlu0 0
      %510 = vperm.xlu0 %509, %v484
      %v511 = vpop.permute.xlu0 %510
      %514 = vset.pattern.permute.xlu0 0
      %515 = vperm.xlu0 %514, %v485
      %v516 = vpop.permute.xlu0 %515
      %519 = vset.pattern.permute.xlu0 0
      %520 = vperm.xlu0 %519, %v486
      %v521 = vpop.permute.xlu0 %520
      %524 = vset.pattern.permute.xlu0 0
      %525 = vperm.xlu0 %524, %v487
      %v526 = vpop.permute.xlu0 %525
      %528 = vmatprep.subr.mxu0 %v307
      %529 = vmatpush1.msra.mxu0 %v309
      %530 = vmatprep.subr.mxu0 %v306
      %531 = vmatpush1.msra.mxu0 %v308
      %532 = vmatprep.subr.mxu0 %v288
      %533 = vmatpush1.msra.mxu0 %v290
      %534 = vmatprep.subr.mxu0 %v287
      %535 = vmatpush1.msra.mxu0 %v289
      %536 = vmatprep.subr.mxu0 %v269
      %537 = vmatpush1.msra.mxu0 %v271
      %538 = vmatprep.subr.mxu0 %v268
      %539 = vmatpush1.msra.mxu0 %v270
      %540 = vmatprep.subr.mxu0 %v250
      %541 = vmatpush1.msra.mxu0 %v252
      %542 = vmatprep.subr.mxu0 %v249
      %543 = vmatpush1.msra.mxu0 %v251
      %544 = vmatprep.subr.mxu0 %v231
      %545 = vmatpush1.msra.mxu0 %v233
      %546 = vmatprep.subr.mxu0 %v230
      %547 = vmatpush1.msra.mxu0 %v232
      %548 = vmatprep.subr.mxu0 %v212
      %549 = vmatpush1.msra.mxu0 %v214
      %550 = vmatprep.subr.mxu0 %v211
      %551 = vmatpush1.msra.mxu0 %v213
      %552 = vmatprep.subr.mxu0 %v193
      %553 = vmatpush1.msra.mxu0 %v195
      %554 = vmatprep.subr.mxu0 %v192
      %555 = vmatpush1.msra.mxu0 %v194
      %556 = vmatprep.subr.mxu0 %v175
      %557 = vmatpush1.msra.mxu0 %v174
      %558 = vmatprep.subr.mxu0 %v172
      %559 = vmatpush1.msra.mxu0 %v171
      %560 = vmatprep.subr.mxu0 %v459
      %561 = vmatpush2.msra.mxu0 %v461
      %562 = vmatprep.subr.mxu0 %v458
      %563 = vmatpush2.msra.mxu0 %v460
      %564 = vmatprep.subr.mxu0 %v440
      %565 = vmatpush2.msra.mxu0 %v442
      %566 = vmatprep.subr.mxu0 %v439
      %567 = vmatpush2.msra.mxu0 %v441
      %568 = vmatprep.subr.mxu0 %v421
      %569 = vmatpush2.msra.mxu0 %v423
      %570 = vmatprep.subr.mxu0 %v420
      %571 = vmatpush2.msra.mxu0 %v422
      %572 = vmatprep.subr.mxu0 %v402
      %573 = vmatpush2.msra.mxu0 %v404
      %574 = vmatprep.subr.mxu0 %v401
      %575 = vmatpush2.msra.mxu0 %v403
      %576 = vmatprep.subr.mxu0 %v383
      %577 = vmatpush2.msra.mxu0 %v385
      %578 = vmatprep.subr.mxu0 %v382
      %579 = vmatpush2.msra.mxu0 %v384
      %580 = vmatprep.subr.mxu0 %v364
      %581 = vmatpush2.msra.mxu0 %v366
      %582 = vmatprep.subr.mxu0 %v363
      %583 = vmatpush2.msra.mxu0 %v365
      %584 = vmatprep.subr.mxu0 %v345
      %585 = vmatpush2.msra.mxu0 %v347
      %586 = vmatprep.subr.mxu0 %v344
      %587 = vmatpush2.msra.mxu0 %v346
      %588 = vmatprep.subr.mxu0 %v326
      %589 = vmatpush2.msra.mxu0 %v328
      %590 = vmatprep.subr.mxu0 %v325
      %591 = vmatpush2.msra.mxu0 %v327
      %592 = vmatprep.mubr.f32.mxu0 %v465
      %593 = vmatmul.mubr.f32.gmra.mxu0 %v464
      %v594 = vpop.f32.mrf.mxu0
      %v595 = vadd.f32 %v491, %v594
      %v596 = vpop.f32.mrf.mxu0
      %v597 = vadd.f32 %v491, %v596
      %598 = vmatprep.mubr.f32.mxu0 %v467
      %599 = vmatmul.mubr.f32.gmra.mxu0 %v466
      %v600 = vpop.f32.mrf.mxu0
      %v601 = vadd.f32 %v496, %v600
      %v602 = vpop.f32.mrf.mxu0
      %v603 = vadd.f32 %v496, %v602
      %604 = vmatprep.mubr.f32.mxu0 %v469
      %605 = vmatmul.mubr.f32.gmra.mxu0 %v468
      %v606 = vpop.f32.mrf.mxu0
      %v607 = vadd.f32 %v501, %v606
      %v608 = vpop.f32.mrf.mxu0
      %v609 = vadd.f32 %v501, %v608
      %610 = vmatprep.mubr.f32.mxu0 %v471
      %611 = vmatmul.mubr.f32.gmra.mxu0 %v470
      %v612 = vpop.f32.mrf.mxu0
      %v613 = vadd.f32 %v506, %v612
      %v614 = vpop.f32.mrf.mxu0
      %v615 = vadd.f32 %v506, %v614
      %616 = vmatprep.mubr.f32.mxu0 %v473
      %617 = vmatmul.mubr.f32.gmra.mxu0 %v472
      %v618 = vpop.f32.mrf.mxu0
      %v619 = vadd.f32 %v511, %v618
      %v620 = vpop.f32.mrf.mxu0
      %v621 = vadd.f32 %v511, %v620
      %622 = vmatprep.mubr.f32.mxu0 %v475
      %623 = vmatmul.mubr.f32.gmra.mxu0 %v474
      %v624 = vpop.f32.mrf.mxu0
      %v625 = vadd.f32 %v516, %v624
      %v626 = vpop.f32.mrf.mxu0
      %v627 = vadd.f32 %v516, %v626
      %628 = vmatprep.mubr.f32.mxu0 %v477
      %629 = vmatmul.mubr.f32.gmra.mxu0 %v476
      %v630 = vpop.f32.mrf.mxu0
      %v631 = vadd.f32 %v521, %v630
      %v632 = vpop.f32.mrf.mxu0
      %v633 = vadd.f32 %v521, %v632
      %634 = vmatprep.mubr.f32.mxu0 %v479
      %635 = vmatmul.mubr.f32.gmra.mxu0 %v478
      %v636 = vpop.f32.mrf.mxu0
      %v637 = vadd.f32 %v526, %v636
      %v638 = vpop.f32.mrf.mxu0
      %v639 = vadd.f32 %v526, %v638
      %640 = vdwg.mxu0
      %641 = vmatprep.subr.mxu0 0.0
      %642 = vmatpush1.msra.mxu0 %v311
      %643 = vmatprep.subr.mxu0 0.0
      %644 = vmatpush1.msra.mxu0 %v310
      %645 = vmatprep.subr.mxu0 0.0
      %646 = vmatpush1.msra.mxu0 %v292
      %647 = vmatprep.subr.mxu0 0.0
      %648 = vmatpush1.msra.mxu0 %v291
      %649 = vmatprep.subr.mxu0 0.0
      %650 = vmatpush1.msra.mxu0 %v273
      %651 = vmatprep.subr.mxu0 0.0
      %652 = vmatpush1.msra.mxu0 %v272
      %653 = vmatprep.subr.mxu0 0.0
      %654 = vmatpush1.msra.mxu0 %v254
      %655 = vmatprep.subr.mxu0 0.0
      %656 = vmatpush1.msra.mxu0 %v253
      %657 = vmatprep.subr.mxu0 0.0
      %658 = vmatpush1.msra.mxu0 %v235
      %659 = vmatprep.subr.mxu0 0.0
      %660 = vmatpush1.msra.mxu0 %v234
      %661 = vmatprep.subr.mxu0 0.0
      %662 = vmatpush1.msra.mxu0 %v216
      %663 = vmatprep.subr.mxu0 0.0
      %664 = vmatpush1.msra.mxu0 %v215
      %665 = vmatprep.subr.mxu0 0.0
      %666 = vmatpush1.msra.mxu0 %v197
      %667 = vmatprep.subr.mxu0 0.0
      %668 = vmatpush1.msra.mxu0 %v196
      %669 = vmatprep.subr.mxu0 0.0
      %670 = vmatpush1.msra.mxu0 %v176
      %671 = vmatprep.subr.mxu0 0.0
      %672 = vmatpush1.msra.mxu0 %v173
      %673 = vmatprep.subr.mxu0 0.0
      %674 = vmatpush2.msra.mxu0 %v463
      %675 = vmatprep.subr.mxu0 0.0
      %676 = vmatpush2.msra.mxu0 %v462
      %677 = vmatprep.subr.mxu0 0.0
      %678 = vmatpush2.msra.mxu0 %v444
      %679 = vmatprep.subr.mxu0 0.0
      %680 = vmatpush2.msra.mxu0 %v443
      %681 = vmatprep.subr.mxu0 0.0
      %682 = vmatpush2.msra.mxu0 %v425
      %683 = vmatprep.subr.mxu0 0.0
      %684 = vmatpush2.msra.mxu0 %v424
      %685 = vmatprep.subr.mxu0 0.0
      %686 = vmatpush2.msra.mxu0 %v406
      %687 = vmatprep.subr.mxu0 0.0
      %688 = vmatpush2.msra.mxu0 %v405
      %689 = vmatprep.subr.mxu0 0.0
      %690 = vmatpush2.msra.mxu0 %v387
      %691 = vmatprep.subr.mxu0 0.0
      %692 = vmatpush2.msra.mxu0 %v386
      %693 = vmatprep.subr.mxu0 0.0
      %694 = vmatpush2.msra.mxu0 %v368
      %695 = vmatprep.subr.mxu0 0.0
      %696 = vmatpush2.msra.mxu0 %v367
      %697 = vmatprep.subr.mxu0 0.0
      %698 = vmatpush2.msra.mxu0 %v349
      %699 = vmatprep.subr.mxu0 0.0
      %700 = vmatpush2.msra.mxu0 %v348
      %701 = vmatprep.subr.mxu0 0.0
      %702 = vmatpush2.msra.mxu0 %v330
      %703 = vmatprep.subr.mxu0 0.0
      %704 = vmatpush2.msra.mxu0 %v329
      %705 = vmatprep.mubr.f32.mxu0 %v465
      %706 = vmatmul.mubr.f32.gmra.mxu0 %v464
      %v707 = vpop.f32.mrf.mxu0
      %v708 = vadd.f32 %v491, %v707
      %v709 = vpop.f32.mrf.mxu0
      %710 = vmatprep.mubr.f32.mxu0 %v467
      %711 = vmatmul.mubr.f32.gmra.mxu0 %v466
      %v712 = vpop.f32.mrf.mxu0
      %v713 = vadd.f32 %v496, %v712
      %v714 = vpop.f32.mrf.mxu0
      %715 = vmatprep.mubr.f32.mxu0 %v469
      %716 = vmatmul.mubr.f32.gmra.mxu0 %v468
      %v717 = vpop.f32.mrf.mxu0
      %v718 = vadd.f32 %v501, %v717
      %v719 = vpop.f32.mrf.mxu0
      %720 = vmatprep.mubr.f32.mxu0 %v471
      %721 = vmatmul.mubr.f32.gmra.mxu0 %v470
      %v722 = vpop.f32.mrf.mxu0
      %v723 = vadd.f32 %v506, %v722
      %v724 = vpop.f32.mrf.mxu0
      %725 = vmatprep.mubr.f32.mxu0 %v473
      %726 = vmatmul.mubr.f32.gmra.mxu0 %v472
      %v727 = vpop.f32.mrf.mxu0
      %v728 = vadd.f32 %v511, %v727
      %v729 = vpop.f32.mrf.mxu0
      %730 = vmatprep.mubr.f32.mxu0 %v475
      %731 = vmatmul.mubr.f32.gmra.mxu0 %v474
      %v732 = vpop.f32.mrf.mxu0
      %v733 = vadd.f32 %v516, %v732
      %v734 = vpop.f32.mrf.mxu0
      %735 = vmatprep.mubr.f32.mxu0 %v477
      %736 = vmatmul.mubr.f32.gmra.mxu0 %v476
      %v737 = vpop.f32.mrf.mxu0
      %v738 = vadd.f32 %v521, %v737
      %v739 = vpop.f32.mrf.mxu0
      %740 = vmatprep.mubr.f32.mxu0 %v479
      %741 = vmatmul.mubr.f32.gmra.mxu0 %v478
      %v742 = vpop.f32.mrf.mxu0
      %v743 = vadd.f32 %v526, %v742
      %v744 = vpop.f32.mrf.mxu0
      %745 = vdwg.mxu0
      %v746 = vmax.f32 %v595, 0.0
      %v747 = vmax.f32 %v597, 0.0
      %v748 = vmax.f32 %v708, 0.0
      %v749 = vmax.f32 %v601, 0.0
      %v750 = vmax.f32 %v603, 0.0
      %v751 = vmax.f32 %v713, 0.0
      %v752 = vmax.f32 %v607, 0.0
      %v753 = vmax.f32 %v609, 0.0
      %v754 = vmax.f32 %v718, 0.0
      %v755 = vmax.f32 %v613, 0.0
      %v756 = vmax.f32 %v615, 0.0
      %v757 = vmax.f32 %v723, 0.0
      %v758 = vmax.f32 %v619, 0.0
      %v759 = vmax.f32 %v621, 0.0
      %v760 = vmax.f32 %v728, 0.0
      %v761 = vmax.f32 %v625, 0.0
      %v762 = vmax.f32 %v627, 0.0
      %v763 = vmax.f32 %v733, 0.0
      %v764 = vmax.f32 %v631, 0.0
      %v765 = vmax.f32 %v633, 0.0
      %v766 = vmax.f32 %v738, 0.0
      %v767 = vmax.f32 %v637, 0.0
      %v768 = vmax.f32 %v639, 0.0
      %v769 = vmax.f32 %v743, 0.0
      %770 = vrot.lane.b32.xlu0 %v746, 127
      %v771 = vpop.permute.xlu0 %770
      %772 = vrot.lane.b32.xlu0 %v749, 127
      %v773 = vpop.permute.xlu0 %772
      %774 = vrot.lane.b32.xlu0 %v752, 127
      %v775 = vpop.permute.xlu0 %774
      %776 = vrot.lane.b32.xlu0 %v755, 127
      %v777 = vpop.permute.xlu0 %776
      %778 = vrot.lane.b32.xlu0 %v758, 127
      %v779 = vpop.permute.xlu0 %778
      %780 = vrot.lane.b32.xlu0 %v761, 127
      %v781 = vpop.permute.xlu0 %780
      %782 = vrot.lane.b32.xlu0 %v764, 127
      %v783 = vpop.permute.xlu0 %782
      %784 = vrot.lane.b32.xlu0 %v767, 127
      %v785 = vpop.permute.xlu0 %784
      %786 = vrot.lane.b32.xlu0 %v747, 127
      %v787 = vpop.permute.xlu0 %786
      %788 = vrot.lane.b32.xlu0 %v750, 127
      %v789 = vpop.permute.xlu0 %788
      %790 = vrot.lane.b32.xlu0 %v753, 127
      %v791 = vpop.permute.xlu0 %790
      %792 = vrot.lane.b32.xlu0 %v756, 127
      %v793 = vpop.permute.xlu0 %792
      %794 = vrot.lane.b32.xlu0 %v759, 127
      %v795 = vpop.permute.xlu0 %794
      %796 = vrot.lane.b32.xlu0 %v762, 127
      %v797 = vpop.permute.xlu0 %796
      %798 = vrot.lane.b32.xlu0 %v765, 127
      %v799 = vpop.permute.xlu0 %798
      %800 = vrot.lane.b32.xlu0 %v768, 127
      %v801 = vpop.permute.xlu0 %800
      %802 = vrot.lane.b32.xlu0 %v748, 127
      %v803 = vpop.permute.xlu0 %802
      %804 = vrot.lane.b32.xlu0 %v751, 127
      %v805 = vpop.permute.xlu0 %804
      %806 = vrot.lane.b32.xlu0 %v754, 127
      %v807 = vpop.permute.xlu0 %806
      %808 = vrot.lane.b32.xlu0 %v757, 127
      %v809 = vpop.permute.xlu0 %808
      %810 = vrot.lane.b32.xlu0 %v760, 127
      %v811 = vpop.permute.xlu0 %810
      %812 = vrot.lane.b32.xlu0 %v763, 127
      %v813 = vpop.permute.xlu0 %812
      %814 = vrot.lane.b32.xlu0 %v766, 127
      %v815 = vpop.permute.xlu0 %814
      %816 = vrot.lane.b32.xlu0 %v769, 127
      %v817 = vpop.permute.xlu0 %816
      %v818 = vsel %vm191, %v787, %v803
      %v819 = vsel %vm191, %v789, %v805
      %v820 = vsel %vm191, %v791, %v807
      %v821 = vsel %vm191, %v793, %v809
      %v822 = vsel %vm191, %v795, %v811
      %v823 = vsel %vm191, %v797, %v813
      %v824 = vsel %vm191, %v799, %v815
      %v825 = vsel %vm191, %v801, %v817
      %v826 = vsel %vm191, %v771, %v787
      %v827 = vsel %vm191, %v773, %v789
      %v828 = vsel %vm191, %v775, %v791
      %v829 = vsel %vm191, %v777, %v793
      %v830 = vsel %vm191, %v779, %v795
      %v831 = vsel %vm191, %v781, %v797
      %v832 = vsel %vm191, %v783, %v799
      %v833 = vsel %vm191, %v785, %v801
      %v834 = vsel %vm191, %v803, %v771
      %v835 = vsel %vm191, %v805, %v773
      %v836 = vsel %vm191, %v807, %v775
      %v837 = vsel %vm191, %v809, %v777
      %v838 = vsel %vm191, %v811, %v779
      %v839 = vsel %vm191, %v813, %v781
      %v840 = vsel %vm191, %v815, %v783
      %v841 = vsel %vm191, %v817, %v785
      %842 = vrot.lane.b32.xlu0 %v746, 126
      %v843 = vpop.permute.xlu0 %842
      %844 = vrot.lane.b32.xlu0 %v749, 126
      %v845 = vpop.permute.xlu0 %844
      %846 = vrot.lane.b32.xlu0 %v752, 126
      %v847 = vpop.permute.xlu0 %846
      %848 = vrot.lane.b32.xlu0 %v755, 126
      %v849 = vpop.permute.xlu0 %848
      %850 = vrot.lane.b32.xlu0 %v758, 126
      %v851 = vpop.permute.xlu0 %850
      %852 = vrot.lane.b32.xlu0 %v761, 126
      %v853 = vpop.permute.xlu0 %852
      %854 = vrot.lane.b32.xlu0 %v764, 126
      %v855 = vpop.permute.xlu0 %854
      %856 = vrot.lane.b32.xlu0 %v767, 126
      %v857 = vpop.permute.xlu0 %856
      %858 = vrot.lane.b32.xlu0 %v747, 126
      %v859 = vpop.permute.xlu0 %858
      %860 = vrot.lane.b32.xlu0 %v750, 126
      %v861 = vpop.permute.xlu0 %860
      %862 = vrot.lane.b32.xlu0 %v753, 126
      %v863 = vpop.permute.xlu0 %862
      %864 = vrot.lane.b32.xlu0 %v756, 126
      %v865 = vpop.permute.xlu0 %864
      %866 = vrot.lane.b32.xlu0 %v759, 126
      %v867 = vpop.permute.xlu0 %866
      %868 = vrot.lane.b32.xlu0 %v762, 126
      %v869 = vpop.permute.xlu0 %868
      %870 = vrot.lane.b32.xlu0 %v765, 126
      %v871 = vpop.permute.xlu0 %870
      %872 = vrot.lane.b32.xlu0 %v768, 126
      %v873 = vpop.permute.xlu0 %872
      %874 = vrot.lane.b32.xlu0 %v748, 126
      %v875 = vpop.permute.xlu0 %874
      %876 = vrot.lane.b32.xlu0 %v751, 126
      %v877 = vpop.permute.xlu0 %876
      %878 = vrot.lane.b32.xlu0 %v754, 126
      %v879 = vpop.permute.xlu0 %878
      %880 = vrot.lane.b32.xlu0 %v757, 126
      %v881 = vpop.permute.xlu0 %880
      %882 = vrot.lane.b32.xlu0 %v760, 126
      %v883 = vpop.permute.xlu0 %882
      %884 = vrot.lane.b32.xlu0 %v763, 126
      %v885 = vpop.permute.xlu0 %884
      %886 = vrot.lane.b32.xlu0 %v766, 126
      %v887 = vpop.permute.xlu0 %886
      %888 = vrot.lane.b32.xlu0 %v769, 126
      %v889 = vpop.permute.xlu0 %888
      %v890 = vsel %vm210, %v859, %v875
      %v891 = vsel %vm210, %v861, %v877
      %v892 = vsel %vm210, %v863, %v879
      %v893 = vsel %vm210, %v865, %v881
      %v894 = vsel %vm210, %v867, %v883
      %v895 = vsel %vm210, %v869, %v885
      %v896 = vsel %vm210, %v871, %v887
      %v897 = vsel %vm210, %v873, %v889
      %v898 = vsel %vm210, %v843, %v859
      %v899 = vsel %vm210, %v845, %v861
      %v900 = vsel %vm210, %v847, %v863
      %v901 = vsel %vm210, %v849, %v865
      %v902 = vsel %vm210, %v851, %v867
      %v903 = vsel %vm210, %v853, %v869
      %v904 = vsel %vm210, %v855, %v871
      %v905 = vsel %vm210, %v857, %v873
      %v906 = vsel %vm210, %v875, %v843
      %v907 = vsel %vm210, %v877, %v845
      %v908 = vsel %vm210, %v879, %v847
      %v909 = vsel %vm210, %v881, %v849
      %v910 = vsel %vm210, %v883, %v851
      %v911 = vsel %vm210, %v885, %v853
      %v912 = vsel %vm210, %v887, %v855
      %v913 = vsel %vm210, %v889, %v857
      %v914 = vmax.f32 %v826, %v898
      %v915 = vmax.f32 %v818, %v890
      %v916 = vmax.f32 %v834, %v906
      %v917 = vmax.f32 %v827, %v899
      %v918 = vmax.f32 %v819, %v891
      %v919 = vmax.f32 %v835, %v907
      %v920 = vmax.f32 %v828, %v900
      %v921 = vmax.f32 %v820, %v892
      %v922 = vmax.f32 %v836, %v908
      %v923 = vmax.f32 %v829, %v901
      %v924 = vmax.f32 %v821, %v893
      %v925 = vmax.f32 %v837, %v909
      %v926 = vmax.f32 %v830, %v902
      %v927 = vmax.f32 %v822, %v894
      %v928 = vmax.f32 %v838, %v910
      %v929 = vmax.f32 %v831, %v903
      %v930 = vmax.f32 %v823, %v895
      %v931 = vmax.f32 %v839, %v911
      %v932 = vmax.f32 %v832, %v904
      %v933 = vmax.f32 %v824, %v896
      %v934 = vmax.f32 %v840, %v912
      %v935 = vmax.f32 %v833, %v905
      %v936 = vmax.f32 %v825, %v897
      %v937 = vmax.f32 %v841, %v913
      %v938 = vmax.f32 %v746, %v914
      %v939 = vmax.f32 %v747, %v915
      %v940 = vmax.f32 %v748, %v916
      %v941 = vmax.f32 %v749, %v917
      %v942 = vmax.f32 %v750, %v918
      %v943 = vmax.f32 %v751, %v919
      %v944 = vmax.f32 %v752, %v920
      %v945 = vmax.f32 %v753, %v921
      %v946 = vmax.f32 %v754, %v922
      %v947 = vmax.f32 %v755, %v923
      %v948 = vmax.f32 %v756, %v924
      %v949 = vmax.f32 %v757, %v925
      %v950 = vmax.f32 %v758, %v926
      %v951 = vmax.f32 %v759, %v927
      %v952 = vmax.f32 %v760, %v928
      %v953 = vmax.f32 %v761, %v929
      %v954 = vmax.f32 %v762, %v930
      %v955 = vmax.f32 %v763, %v931
      %v956 = vmax.f32 %v764, %v932
      %v957 = vmax.f32 %v765, %v933
      %v958 = vmax.f32 %v766, %v934
      %v959 = vmax.f32 %v767, %v935
      %v960 = vmax.f32 %v768, %v936
      %v961 = vmax.f32 %v769, %v937
      %962 = vrot.lane.b32.xlu0 %v938, 110
      %v963 = vpop.permute.xlu0 %962
      %964 = vrot.lane.b32.xlu0 %v941, 110
      %v965 = vpop.permute.xlu0 %964
      %966 = vrot.lane.b32.xlu0 %v944, 110
      %v967 = vpop.permute.xlu0 %966
      %968 = vrot.lane.b32.xlu0 %v947, 110
      %v969 = vpop.permute.xlu0 %968
      %970 = vrot.lane.b32.xlu0 %v950, 110
      %v971 = vpop.permute.xlu0 %970
      %972 = vrot.lane.b32.xlu0 %v953, 110
      %v973 = vpop.permute.xlu0 %972
      %974 = vrot.lane.b32.xlu0 %v956, 110
      %v975 = vpop.permute.xlu0 %974
      %976 = vrot.lane.b32.xlu0 %v959, 110
      %v977 = vpop.permute.xlu0 %976
      %978 = vrot.lane.b32.xlu0 %v939, 110
      %v979 = vpop.permute.xlu0 %978
      %980 = vrot.lane.b32.xlu0 %v942, 110
      %v981 = vpop.permute.xlu0 %980
      %982 = vrot.lane.b32.xlu0 %v945, 110
      %v983 = vpop.permute.xlu0 %982
      %984 = vrot.lane.b32.xlu0 %v948, 110
      %v985 = vpop.permute.xlu0 %984
      %986 = vrot.lane.b32.xlu0 %v951, 110
      %v987 = vpop.permute.xlu0 %986
      %988 = vrot.lane.b32.xlu0 %v954, 110
      %v989 = vpop.permute.xlu0 %988
      %990 = vrot.lane.b32.xlu0 %v957, 110
      %v991 = vpop.permute.xlu0 %990
      %992 = vrot.lane.b32.xlu0 %v960, 110
      %v993 = vpop.permute.xlu0 %992
      %994 = vrot.lane.b32.xlu0 %v940, 110
      %v995 = vpop.permute.xlu0 %994
      %996 = vrot.lane.b32.xlu0 %v943, 110
      %v997 = vpop.permute.xlu0 %996
      %998 = vrot.lane.b32.xlu0 %v946, 110
      %v999 = vpop.permute.xlu0 %998
      %1000 = vrot.lane.b32.xlu0 %v949, 110
      %v1001 = vpop.permute.xlu0 %1000
      %1002 = vrot.lane.b32.xlu0 %v952, 110
      %v1003 = vpop.permute.xlu0 %1002
      %1004 = vrot.lane.b32.xlu0 %v955, 110
      %v1005 = vpop.permute.xlu0 %1004
      %1006 = vrot.lane.b32.xlu0 %v958, 110
      %v1007 = vpop.permute.xlu0 %1006
      %1008 = vrot.lane.b32.xlu0 %v961, 110
      %v1009 = vpop.permute.xlu0 %1008
      %v1010 = vsel %vm248, %v979, %v995
      %v1011 = vsel %vm248, %v981, %v997
      %v1012 = vsel %vm248, %v983, %v999
      %v1013 = vsel %vm248, %v985, %v1001
      %v1014 = vsel %vm248, %v987, %v1003
      %v1015 = vsel %vm248, %v989, %v1005
      %v1016 = vsel %vm248, %v991, %v1007
      %v1017 = vsel %vm248, %v993, %v1009
      %v1018 = vsel %vm248, %v963, %v979
      %v1019 = vsel %vm248, %v965, %v981
      %v1020 = vsel %vm248, %v967, %v983
      %v1021 = vsel %vm248, %v969, %v985
      %v1022 = vsel %vm248, %v971, %v987
      %v1023 = vsel %vm248, %v973, %v989
      %v1024 = vsel %vm248, %v975, %v991
      %v1025 = vsel %vm248, %v977, %v993
      %v1026 = vsel %vm248, %v995, %v963
      %v1027 = vsel %vm248, %v997, %v965
      %v1028 = vsel %vm248, %v999, %v967
      %v1029 = vsel %vm248, %v1001, %v969
      %v1030 = vsel %vm248, %v1003, %v971
      %v1031 = vsel %vm248, %v1005, %v973
      %v1032 = vsel %vm248, %v1007, %v975
      %v1033 = vsel %vm248, %v1009, %v977
      %1034 = vrot.lane.b32.xlu0 %v938, 92
      %v1035 = vpop.permute.xlu0 %1034
      %1036 = vrot.lane.b32.xlu0 %v941, 92
      %v1037 = vpop.permute.xlu0 %1036
      %1038 = vrot.lane.b32.xlu0 %v944, 92
      %v1039 = vpop.permute.xlu0 %1038
      %1040 = vrot.lane.b32.xlu0 %v947, 92
      %v1041 = vpop.permute.xlu0 %1040
      %1042 = vrot.lane.b32.xlu0 %v950, 92
      %v1043 = vpop.permute.xlu0 %1042
      %1044 = vrot.lane.b32.xlu0 %v953, 92
      %v1045 = vpop.permute.xlu0 %1044
      %1046 = vrot.lane.b32.xlu0 %v956, 92
      %v1047 = vpop.permute.xlu0 %1046
      %1048 = vrot.lane.b32.xlu0 %v959, 92
      %v1049 = vpop.permute.xlu0 %1048
      %1050 = vrot.lane.b32.xlu0 %v939, 92
      %v1051 = vpop.permute.xlu0 %1050
      %1052 = vrot.lane.b32.xlu0 %v942, 92
      %v1053 = vpop.permute.xlu0 %1052
      %1054 = vrot.lane.b32.xlu0 %v945, 92
      %v1055 = vpop.permute.xlu0 %1054
      %1056 = vrot.lane.b32.xlu0 %v948, 92
      %v1057 = vpop.permute.xlu0 %1056
      %1058 = vrot.lane.b32.xlu0 %v951, 92
      %v1059 = vpop.permute.xlu0 %1058
      %1060 = vrot.lane.b32.xlu0 %v954, 92
      %v1061 = vpop.permute.xlu0 %1060
      %1062 = vrot.lane.b32.xlu0 %v957, 92
      %v1063 = vpop.permute.xlu0 %1062
      %1064 = vrot.lane.b32.xlu0 %v960, 92
      %v1065 = vpop.permute.xlu0 %1064
      %1066 = vrot.lane.b32.xlu0 %v940, 92
      %v1067 = vpop.permute.xlu0 %1066
      %1068 = vrot.lane.b32.xlu0 %v943, 92
      %v1069 = vpop.permute.xlu0 %1068
      %1070 = vrot.lane.b32.xlu0 %v946, 92
      %v1071 = vpop.permute.xlu0 %1070
      %1072 = vrot.lane.b32.xlu0 %v949, 92
      %v1073 = vpop.permute.xlu0 %1072
      %1074 = vrot.lane.b32.xlu0 %v952, 92
      %v1075 = vpop.permute.xlu0 %1074
      %1076 = vrot.lane.b32.xlu0 %v955, 92
      %v1077 = vpop.permute.xlu0 %1076
      %1078 = vrot.lane.b32.xlu0 %v958, 92
      %v1079 = vpop.permute.xlu0 %1078
      %1080 = vrot.lane.b32.xlu0 %v961, 92
      %v1081 = vpop.permute.xlu0 %1080
      %v1082 = vsel %vm324, %v1051, %v1067
      %v1083 = vsel %vm324, %v1053, %v1069
      %v1084 = vsel %vm324, %v1055, %v1071
      %v1085 = vsel %vm324, %v1057, %v1073
      %v1086 = vsel %vm324, %v1059, %v1075
      %v1087 = vsel %vm324, %v1061, %v1077
      %v1088 = vsel %vm324, %v1063, %v1079
      %v1089 = vsel %vm324, %v1065, %v1081
      %v1090 = vsel %vm324, %v1035, %v1051
      %v1091 = vsel %vm324, %v1037, %v1053
      %v1092 = vsel %vm324, %v1039, %v1055
      %v1093 = vsel %vm324, %v1041, %v1057
      %v1094 = vsel %vm324, %v1043, %v1059
      %v1095 = vsel %vm324, %v1045, %v1061
      %v1096 = vsel %vm324, %v1047, %v1063
      %v1097 = vsel %vm324, %v1049, %v1065
      %v1098 = vsel %vm324, %v1067, %v1035
      %v1099 = vsel %vm324, %v1069, %v1037
      %v1100 = vsel %vm324, %v1071, %v1039
      %v1101 = vsel %vm324, %v1073, %v1041
      %v1102 = vsel %vm324, %v1075, %v1043
      %v1103 = vsel %vm324, %v1077, %v1045
      %v1104 = vsel %vm324, %v1079, %v1047
      %v1105 = vsel %vm324, %v1081, %v1049
      %v1106 = vmax.f32 %v1018, %v1090
      %v1107 = vmax.f32 %v1010, %v1082
      %v1108 = vmax.f32 %v1026, %v1098
      %v1109 = vmax.f32 %v1019, %v1091
      %v1110 = vmax.f32 %v1011, %v1083
      %v1111 = vmax.f32 %v1027, %v1099
      %v1112 = vmax.f32 %v1020, %v1092
      %v1113 = vmax.f32 %v1012, %v1084
      %v1114 = vmax.f32 %v1028, %v1100
      %v1115 = vmax.f32 %v1021, %v1093
      %v1116 = vmax.f32 %v1013, %v1085
      %v1117 = vmax.f32 %v1029, %v1101
      %v1118 = vmax.f32 %v1022, %v1094
      %v1119 = vmax.f32 %v1014, %v1086
      %v1120 = vmax.f32 %v1030, %v1102
      %v1121 = vmax.f32 %v1023, %v1095
      %v1122 = vmax.f32 %v1015, %v1087
      %v1123 = vmax.f32 %v1031, %v1103
      %v1124 = vmax.f32 %v1024, %v1096
      %v1125 = vmax.f32 %v1016, %v1088
      %v1126 = vmax.f32 %v1032, %v1104
      %v1127 = vmax.f32 %v1025, %v1097
      %v1128 = vmax.f32 %v1017, %v1089
      %v1129 = vmax.f32 %v1033, %v1105
      %v1130 = vmax.f32 %v938, %v1106
      %v1131 = vmax.f32 %v939, %v1107
      %v1132 = vmax.f32 %v940, %v1108
      %v1133 = vmax.f32 %v941, %v1109
      %v1134 = vmax.f32 %v942, %v1110
      %v1135 = vmax.f32 %v943, %v1111
      %v1136 = vmax.f32 %v944, %v1112
      %v1137 = vmax.f32 %v945, %v1113
      %v1138 = vmax.f32 %v946, %v1114
      %v1139 = vmax.f32 %v947, %v1115
      %v1140 = vmax.f32 %v948, %v1116
      %v1141 = vmax.f32 %v949, %v1117
      %v1142 = vmax.f32 %v950, %v1118
      %v1143 = vmax.f32 %v951, %v1119
      %v1144 = vmax.f32 %v952, %v1120
      %v1145 = vmax.f32 %v953, %v1121
      %v1146 = vmax.f32 %v954, %v1122
      %v1147 = vmax.f32 %v955, %v1123
      %v1148 = vmax.f32 %v956, %v1124
      %v1149 = vmax.f32 %v957, %v1125
      %v1150 = vmax.f32 %v958, %v1126
      %v1151 = vmax.f32 %v959, %v1127
      %v1152 = vmax.f32 %v960, %v1128
      %v1153 = vmax.f32 %v961, %v1129
      %1154 = vst [vmem:[%s170] sm:$0xff] %v1130
      %1155 = vst [vmem:[%s170 + $0x8] sm:$0xff] %v1131
      %1156 = vst [vmem:[%s170 + $0x10] sm:$0xff] %v1132
      %1157 = vst [vmem:[%s170 + $0x18] sm:$0xff] %v1133
      %1158 = vst [vmem:[%s170 + $0x20] sm:$0xff] %v1134
      %1159 = vst [vmem:[%s170 + $0x28] sm:$0xff] %v1135
      %1160 = vst [vmem:[%s170 + $0x30] sm:$0xff] %v1136
      %1161 = vst [vmem:[%s170 + $0x38] sm:$0xff] %v1137
      %1162 = vst [vmem:[%s170 + $0x40] sm:$0xff] %v1138
      %1163 = vst [vmem:[%s170 + $0x48] sm:$0xff] %v1139
      %1164 = vst [vmem:[%s170 + $0x50] sm:$0xff] %v1140
      %1165 = vst [vmem:[%s170 + $0x58] sm:$0xff] %v1141
      %1166 = vst [vmem:[%s170 + $0x60] sm:$0xff] %v1142
      %1167 = vst [vmem:[%s170 + $0x68] sm:$0xff] %v1143
      %1168 = vst [vmem:[%s170 + $0x70] sm:$0xff] %v1144
      %1169 = vst [vmem:[%s170 + $0x78] sm:$0xff] %v1145
      %1170 = vst [vmem:[%s170 + $0x80] sm:$0xff] %v1146
      %1171 = vst [vmem:[%s170 + $0x88] sm:$0xff] %v1147
      %1172 = vst [vmem:[%s170 + $0x90] sm:$0xff] %v1148
      %1173 = vst [vmem:[%s170 + $0x98] sm:$0xff] %v1149
      %1174 = vst [vmem:[%s170 + $0xa0] sm:$0xff] %v1150
      %1175 = vst [vmem:[%s170 + $0xa8] sm:$0xff] %v1151
      %1176 = vst [vmem:[%s170 + $0xb0] sm:$0xff] %v1152
      %1177 = vst [vmem:[%s170 + $0xb8] sm:$0xff] %v1153
      %p1178 = scmp.lt.s32.totalorder %s14, 1
      %s1179 = scalar_select %p1178, %s14, 1
      %s1180 = smul.addr %s1179, 24
      %s1181 = smul.addr %s1180, 8
      %s1182 = scalar_lea.vmem %s3, %s1181
      // Predicated region
      $region33: #{inception_stem.1} parent=31 // pred_check
        %p1183 = pneg %p100
      $region34: #{inception_stem.1} parent=31 // pred_check_branch
        %1185 = sbr.rel (%p1183) target = $region36
      $region35: #{inception_stem.1} parent=31 // pred_region
        _
      $region36: #{inception_stem.1} parent=31 // pred_fallthru
        _
    $region32: #{inception_stem.1} parent=5 // pred_fallthru
      _
    %p1186 = scmp.le.s32.totalorder 2, %s9
    // Predicated region
    $region37: #{inception_stem.1} parent=5 // pred_check
      %p1187 = pneg %p1186
    $region38: #{inception_stem.1} parent=5 // pred_check_branch
      %1189 = sbr.rel (%p1187) target = $region40
    $region39: #{inception_stem.1} parent=5 // pred_region
      %s1190 = ssub.s32 %s9, 2
      // Predicated region
      $region41: #{inception_stem.1} parent=39 // pred_check
        %p1191 = pneg %p106
      $region42: #{inception_stem.1} parent=39 // pred_check_branch
        %1193 = sbr.rel (%p1191) target = $region44
      $region43: #{inception_stem.1} parent=39 // pred_region
        %p1194 = scmp.lt.s32.totalorder %s15, 1
        %s1195 = scalar_select %p1194, %s15, 1
        %s1196 = smul.addr %s1195, 24
        %s1197 = smul.addr %s1196, 8
        %s1198 = scalar_lea.vmem %s3, %s1197
      $region44: #{inception_stem.1} parent=39 // pred_fallthru
        _
    $region40: #{inception_stem.1} parent=5 // pred_fallthru
      _
  $region6: #{inception_stem.1} parent=0 // loop_footer
    %s13 = sadd.s32 1, %s9
  $region7: #{inception_stem.1} parent=0 // loop_footer_branch
    %8 = sbr.rel target = $region3
  $region8: #{inception_stem.1} parent=0 // loop_exit
    _

</llo_original>
